<compile_context>
chip_gen: v5e
topology: v5e:2x2
jax: 0.10.0
libtpu: 0.0.40
codegen_flags: <defaults>
</compile_context>

<pallas_src>
from functools import lru_cache, partial
import re
from typing import Optional, Tuple

import jax
import jax.numpy as jnp
from jax.experimental import pallas as pl
from jax.experimental.pallas import tpu as pltpu


def _round_up(n: int, m: int) -> int:
    return ((n + m - 1) // m) * m


@lru_cache(maxsize=1)
def _tpu_target():
    """Returns (tpu_generation, tensorcores_per_chip, usable_vmem_cap_bytes)."""
    version = 7  # unknown -> assume the most constrained target (v7x-like)
    try:
        kind = jax.devices()[0].device_kind.lower()
        m = re.search(r"(\d+)", kind)
        if m:
            version = int(m.group(1))
    except Exception:
        pass
    num_tc = 2 if version >= 7 else 1  # v7x has 2 TensorCores per chip
    try:
        phys = int(pltpu.get_tpu_info().vmem_capacity_bytes)
    except Exception:
        phys = (64 << 20) if version >= 7 else (128 << 20)
    # Leave headroom below physical VMEM for Mosaic internal scratch:
    # ~96 MiB usable on v5e/v6e (128 MiB), ~48 MiB on v7x (64 MiB).
    cap = max(min(int(phys * 0.75), phys - (16 << 20)), 16 << 20)
    return version, num_tc, cap


# --------------------------------------------------------------------------- #
# Fused path: the whole MLP in one kernel, weights resident in VMEM.
# --------------------------------------------------------------------------- #
def _fused_mlp_kernel(*refs, n_layers, relu_flags, compute_dtype, epilogue_dtype):
    """All layers for one batch tile; activations never leave VMEM/vregs.

    refs = (x_ref, w0, b0, w1, b1, ..., o_ref). Weights/biases are already in
    the MXU compute dtype (pre-cast once on the host, not per grid step).
    """
    x_ref, o_ref = refs[0], refs[-1]
    h = x_ref[...]
    for i in range(n_layers):
        w_ref, b_ref = refs[1 + 2 * i], refs[2 + 2 * i]
        acc = jnp.dot(h.astype(compute_dtype), w_ref[...],
                      preferred_element_type=jnp.float32)
        # bf16 epilogue on v6e/v7x (halves VPU work + activation vregs);
        # f32 on v5e and always for the final layer's output.
        ep = jnp.float32 if i == n_layers - 1 else epilogue_dtype
        h = acc.astype(ep) + b_ref[...].astype(ep)
        if relu_flags[i]:
            h = jnp.maximum(h, 0.0)
    o_ref[...] = h.astype(o_ref.dtype)


# --------------------------------------------------------------------------- #
# Streamed fallback: per-layer tiled matmul, weight K/N tiles stream via grid.
# --------------------------------------------------------------------------- #
def _linear_layer_kernel(x_ref, w_ref, b_ref, o_ref, acc_ref, *,
                         relu, compute_dtype):
    k = pl.program_id(2)

    @pl.when(k == 0)
    def _():
        acc_ref[...] = jnp.zeros_like(acc_ref)

    acc_ref[...] += jnp.dot(x_ref[...].astype(compute_dtype), w_ref[...],
                            preferred_element_type=jnp.float32)

    @pl.when(k == pl.num_programs(2) - 1)
    def _():
        h = acc_ref[...] + b_ref[...].astype(jnp.float32)
        if relu:
            h = jnp.maximum(h, 0.0)
        o_ref[...] = h.astype(o_ref.dtype)


def _pick_tile(dim, candidates=(512, 256, 128)):
    for c in candidates:
        if dim % c == 0:
            return c
    return dim  # small / ragged dim: single full-extent block (legal)


def _linear_pallas(x, w, b, *, relu, out_dtype, tm, compute_dtype):
    M, K = x.shape
    Kw, N = w.shape
    assert K == Kw
    tn = _pick_tile(N)
    tk = _pick_tile(K)
    grid = (M // tm, N // tn, K // tk)
    cost = pl.CostEstimate(
        flops=2 * M * K * N,
        transcendentals=0,
        bytes_accessed=int(x.size * x.dtype.itemsize + w.size * w.dtype.itemsize
                           + b.size * b.dtype.itemsize
                           + M * N * jnp.dtype(out_dtype).itemsize))
    return pl.pallas_call(
        partial(_linear_layer_kernel, relu=relu, compute_dtype=compute_dtype),
        out_shape=jax.ShapeDtypeStruct((M, N), out_dtype),
        grid_spec=pltpu.PrefetchScalarGridSpec(
            num_scalar_prefetch=0,
            grid=grid,
            in_specs=[pl.BlockSpec((tm, tk), lambda i, j, k: (i, k)),
                      pl.BlockSpec((tk, tn), lambda i, j, k: (k, j)),
                      pl.BlockSpec((1, tn), lambda i, j, k: (0, j))],
            out_specs=pl.BlockSpec((tm, tn), lambda i, j, k: (i, j)),
            scratch_shapes=[pltpu.VMEM((tm, tn), jnp.float32)]),
        compiler_params=pltpu.CompilerParams(
            dimension_semantics=("parallel", "parallel", "arbitrary")),
        cost_estimate=cost,
    )(x, w, b)


def _streamed_forward(x, padded_params, relu_flags, output_size,
                      compute_dtype, tb):
    """Used when parameters do not fit resident in VMEM (matters ~2x sooner on
    v7x's 64 MiB). Intermediate activations round-trip HBM in compute_dtype."""
    B = x.shape[0]
    b_pad = _round_up(_round_up(max(B, 1), 8), tb)
    h = x if b_pad == B else jnp.zeros((b_pad, x.shape[1]), x.dtype).at[:B].set(x)
    n_layers = len(padded_params)
    for i, ((w, b), relu) in enumerate(zip(padded_params, relu_flags)):
        out_dtype = jnp.float32 if i == n_layers - 1 else compute_dtype
        h = _linear_pallas(h, w, b, relu=relu, out_dtype=out_dtype,
                           tm=tb, compute_dtype=compute_dtype)
    return h[:B, :output_size]


# --------------------------------------------------------------------------- #
# Top-level forward
# --------------------------------------------------------------------------- #
def mlp_forward_pallas(x, padded_params, relu_flags, input_size, output_size,
                       compute_dtype=jnp.bfloat16, force_streamed=False):
    version, num_tc, vmem_cap = _tpu_target()
    compute_dtype = jnp.dtype(compute_dtype)
    # bf16 VALU epilogue only where it exists (v6e/v7x); f32 otherwise.
    epilogue_dtype = (compute_dtype
                      if (compute_dtype == jnp.dtype(jnp.bfloat16) and version >= 6)
                      else jnp.dtype(jnp.float32))

    B = x.shape[0]
    n_layers = len(padded_params)
    din0 = padded_params[0][0].shape[0]           # == input_size (unpadded)
    dims = [din0] + [w.shape[1] for w, _ in padded_params]
    dout_pad = dims[-1]

    param_bytes = sum(w.size * w.dtype.itemsize + b.size * b.dtype.itemsize
                      for w, b in padded_params)

    # ---- batch tiling (generation aware) ------------------------------------
    b8 = _round_up(max(B, 1), 8)                  # f32 sublane alignment
    tb_target = 256 if num_tc >= 2 else 512       # amortize ~0.35us/grid-step
    if b8 > tb_target:
        tb = tb_target
    else:
        tb = b8
        if num_tc >= 2 and b8 >= 16:
            tb = _round_up(b8 // 2, 8)            # >=2 tiles so both v7x TCs work

    def fused_vmem_need(tb_):
        # Conservative: weights counted double-buffered (in case Buffered(1)
        # is unavailable) + double-buffered x/out tiles + all live activations.
        need = 2 * param_bytes
        need += 2 * tb_ * dims[0] * x.dtype.itemsize
        need += 2 * tb_ * dims[-1] * 4
        need += sum(tb_ * d * 4 for d in dims[1:])
        return need + (2 << 20)                   # margin for internal scratch

    while tb > 8 and fused_vmem_need(tb) > vmem_cap:
        tb = max(8, _round_up(tb // 2, 8))

    if force_streamed or fused_vmem_need(tb) > vmem_cap:
        # Parameters outgrow the per-generation VMEM cap: stream weight tiles
        # layer by layer instead of failing to compile.
        return _streamed_forward(x, padded_params, relu_flags, output_size,
                                 compute_dtype, tb)

    # ---- fused single-kernel path --------------------------------------------
    b_pad = _round_up(b8, tb)
    # Only the batch dim is (maybe) padded in HBM; the feature dim keeps its
    # true size (block last dim == full array dim is legal).
    x_in = x if b_pad == B else jnp.zeros((b_pad, din0), x.dtype).at[:B].set(x)
    flat_params = [a for wb in padded_params for a in wb]

    vmem_bytes = int(min(vmem_cap, max(fused_vmem_need(tb), 16 << 20)))
    cost = pl.CostEstimate(
        flops=2 * b_pad * sum(w.shape[0] * w.shape[1] for w, _ in padded_params),
        transcendentals=0,
        bytes_accessed=int(x_in.size * x_in.dtype.itemsize + param_bytes
                           + b_pad * dout_pad * 4))

    def _run(single_buffer_weights: bool):
        in_specs = [pl.BlockSpec((tb, din0), lambda i: (i, 0))]
        for w, b in padded_params:
            for arr in (w, b):
                if single_buffer_weights:
                    # Constant block index -> never re-fetched; one buffer
                    # halves the resident parameter VMEM vs default 2-deep.
                    spec = pl.BlockSpec(arr.shape, lambda i: (0, 0),
                                        pipeline_mode=pl.Buffered(1))
                else:
                    spec = pl.BlockSpec(arr.shape, lambda i: (0, 0))
                in_specs.append(spec)
        return pl.pallas_call(
            partial(_fused_mlp_kernel, n_layers=n_layers, relu_flags=relu_flags,
                    compute_dtype=compute_dtype, epilogue_dtype=epilogue_dtype),
            out_shape=jax.ShapeDtypeStruct((b_pad, dout_pad), jnp.float32),
            grid_spec=pltpu.PrefetchScalarGridSpec(
                num_scalar_prefetch=0,
                grid=(b_pad // tb,),
                in_specs=in_specs,
                out_specs=pl.BlockSpec((tb, dout_pad), lambda i: (i, 0)),
            ),
            compiler_params=pltpu.CompilerParams(
                dimension_semantics=("parallel",),   # batch tiles independent
                vmem_limit_bytes=vmem_bytes),
            cost_estimate=cost,
        )(x_in, *flat_params)

    try:
        out_padded = _run(single_buffer_weights=True)
    except Exception:
        # pl.Buffered(1) not supported by this jax build: fall back to the
        # (known-good) default double-buffered weight blocks.
        out_padded = _run(single_buffer_weights=False)

    return out_padded[:B, :output_size]


class MLP:
    """JAX/Pallas port of the PyTorch MLP (single fused TPU kernel by default)."""

    def __init__(self, input_size: int, output_size: int,
                 layers: Tuple[int, ...], head: Optional[object],
                 key: jax.Array, compute_dtype=jnp.bfloat16):
        if not layers:
            raise ValueError("There should be at least 1 hidden layer")
        if head is not None:
            # TODO(synk): arbitrary `head` nn.Module has no generic Pallas
            # equivalent; only head=None is supported here.
            raise NotImplementedError("head must be None")

        dims = [input_size] + list(layers) + [output_size]
        n_lin = len(dims) - 1
        self.input_size = input_size
        self.output_size = output_size
        self.compute_dtype = jnp.dtype(compute_dtype)
        # ReLU only follows Linear(layers[i], layers[i+1]): linear idx 1..n_lin-2.
        self.relu_flags = tuple(1 <= i <= n_lin - 2 for i in range(n_lin))

        self.raw_params = []      # unpadded f32, for the pure-JAX reference
        self.padded_params = []   # padded + pre-cast to compute_dtype
        for i, (din, dout) in enumerate(zip(dims[:-1], dims[1:])):
            key, kw, kb = jax.random.split(key, 3)
            # torch.nn.Linear default init: U(-1/sqrt(fan_in), 1/sqrt(fan_in))
            bound = 1.0 / (din ** 0.5)
            w = jax.random.uniform(kw, (din, dout), jnp.float32, -bound, bound)
            bb = jax.random.uniform(kb, (dout,), jnp.float32, -bound, bound)
            self.raw_params.append((w, bb))
            # Feature dims padded to 128 (lane-dense outputs, full MXU tiles);
            # layer 0 keeps its true input dim so x needs no feature padding.
            din_p = din if i == 0 else _round_up(din, 128)
            dout_p = _round_up(dout, 128)
            w_pad = jnp.zeros((din_p, dout_p), jnp.float32).at[:din, :dout].set(w)
            b_pad = jnp.zeros((1, dout_p), jnp.float32).at[:, :dout].set(bb)
            # Pre-cast once to the MXU compute dtype: halves weight DMA/VMEM for
            # bf16 and removes the per-grid-step in-kernel cast.
            self.padded_params.append((w_pad.astype(self.compute_dtype),
                                       b_pad.astype(self.compute_dtype)))

    def __call__(self, x: jax.Array, force_streamed: bool = False) -> jax.Array:
        return mlp_forward_pallas(x, self.padded_params, self.relu_flags,
                                  self.input_size, self.output_size,
                                  compute_dtype=self.compute_dtype,
                                  force_streamed=force_streamed)


def _reference_forward(mlp: MLP, x: jax.Array) -> jax.Array:
    """Plain-JAX reference (unpadded f32 weights) for correctness checking."""
    for (w, b), relu in zip(mlp.raw_params, mlp.relu_flags):
        x = x @ w + b
        if relu:
            x = jnp.maximum(x, 0.0)
    return x


if __name__ == "__main__":
    key = jax.random.PRNGKey(0)
    k_init, k_x = jax.random.split(key)

    batch = 8
    input_size = 16
    hidden = (32, 32)
    output_size = 8

    x = jax.random.normal(k_x, (batch, input_size), jnp.float32)

    # Default path: bf16 MXU inputs, f32 accumulation, fused single kernel.
    mlp_bf16 = MLP(input_size, output_size, hidden, head=None, key=k_init)
    out = jax.block_until_ready(mlp_bf16(x))
    ref = _reference_forward(mlp_bf16, x)
    assert out.shape == (batch, output_size)
    assert out.dtype == jnp.float32
    assert jnp.allclose(out, ref, atol=5e-2, rtol=5e-2), "bf16 fused path mismatch"

    # f32 compute path: must match the f32 reference tightly.
    mlp_f32 = MLP(input_size, output_size, hidden, head=None, key=k_init,
                  compute_dtype=jnp.float32)
    ref_f32 = _reference_forward(mlp_f32, x)
    out_f32 = jax.block_until_ready(mlp_f32(x))
    assert jnp.allclose(out_f32, ref_f32, atol=1e-5, rtol=1e-5), \
        "f32 fused path mismatch"

    # Streamed-weight fallback path (used when params outgrow the VMEM cap).
    out_stream = jax.block_until_ready(mlp_f32(x, force_streamed=True))
    assert jnp.allclose(out_stream, ref_f32, atol=1e-5, rtol=1e-5), \
        "streamed fallback path mismatch"

    print("KERNEL_OK")
</pallas_src>

<mosaic_0001>
module attributes {stable_mosaic.version = 11 : i64} {
  func.func @_fused_mlp_kernel(%arg0: i32, %arg1: memref<8x16xf32, #tpu.memory_space<vmem>>, %arg2: memref<16x128xbf16, #tpu.memory_space<vmem>>, %arg3: memref<1x128xbf16, #tpu.memory_space<vmem>>, %arg4: memref<128x128xbf16, #tpu.memory_space<vmem>>, %arg5: memref<1x128xbf16, #tpu.memory_space<vmem>>, %arg6: memref<128x128xbf16, #tpu.memory_space<vmem>>, %arg7: memref<1x128xbf16, #tpu.memory_space<vmem>>, %arg8: memref<8x128xf32, #tpu.memory_space<vmem>>) attributes {dimension_semantics = [#tpu.dimension_semantics<parallel>], iteration_bounds = array<i64: 1>, scalar_prefetch = 0 : i64, scratch_operands = 0 : i64, tpu.core_type = #tpu.core_type<tc>, window_params = [{transform_indices = @transform_0, window_bounds = array<i64: 8, 16>}, {pipeline_mode = #tpu.pipeline_mode<synchronous>, transform_indices = @transform_1, window_bounds = array<i64: 16, 128>}, {pipeline_mode = #tpu.pipeline_mode<synchronous>, transform_indices = @transform_2, window_bounds = array<i64: 1, 128>}, {pipeline_mode = #tpu.pipeline_mode<synchronous>, transform_indices = @transform_3, window_bounds = array<i64: 128, 128>}, {pipeline_mode = #tpu.pipeline_mode<synchronous>, transform_indices = @transform_4, window_bounds = array<i64: 1, 128>}, {pipeline_mode = #tpu.pipeline_mode<synchronous>, transform_indices = @transform_5, window_bounds = array<i64: 128, 128>}, {pipeline_mode = #tpu.pipeline_mode<synchronous>, transform_indices = @transform_6, window_bounds = array<i64: 1, 128>}, {transform_indices = @transform_7, window_bounds = array<i64: 8, 128>}]} {
    %c0 = arith.constant 0 : index
    %c0_0 = arith.constant 0 : index
    %0 = vector.load %arg1[%c0, %c0_0] : memref<8x16xf32, #tpu.memory_space<vmem>>, vector<8x16xf32>
    %1 = arith.truncf %0 : vector<8x16xf32> to vector<8x16xbf16>
    %c0_1 = arith.constant 0 : index
    %c0_2 = arith.constant 0 : index
    %2 = vector.load %arg2[%c0_1, %c0_2] : memref<16x128xbf16, #tpu.memory_space<vmem>>, vector<16x128xbf16>
    %cst = arith.constant dense<0.000000e+00> : vector<8x128xf32>
    %3 = tpu.matmul %1, %2, %cst {dimension_numbers = #tpu.dot_dimension_numbers<[1], [0], [0], [1], [0, 0, 1, 1], [], []>} : vector<8x16xbf16>, vector<16x128xbf16>, vector<8x128xf32> -> vector<8x128xf32>
    %4 = arith.truncf %3 : vector<8x128xf32> to vector<8x128xbf16>
    %c0_3 = arith.constant 0 : index
    %c0_4 = arith.constant 0 : index
    %5 = vector.load %arg3[%c0_3, %c0_4] : memref<1x128xbf16, #tpu.memory_space<vmem>>, vector<1x128xbf16>
    %6 = vector.broadcast %5 : vector<1x128xbf16> to vector<8x128xbf16>
    %7 = arith.addf %4, %6 : vector<8x128xbf16>
    %c0_5 = arith.constant 0 : index
    %c0_6 = arith.constant 0 : index
    %8 = vector.load %arg4[%c0_5, %c0_6] : memref<128x128xbf16, #tpu.memory_space<vmem>>, vector<128x128xbf16>
    %cst_7 = arith.constant dense<0.000000e+00> : vector<8x128xf32>
    %9 = tpu.matmul %7, %8, %cst_7 {dimension_numbers = #tpu.dot_dimension_numbers<[1], [0], [0], [1], [0, 0, 1, 1], [], []>} : vector<8x128xbf16>, vector<128x128xbf16>, vector<8x128xf32> -> vector<8x128xf32>
    %10 = arith.truncf %9 : vector<8x128xf32> to vector<8x128xbf16>
    %c0_8 = arith.constant 0 : index
    %c0_9 = arith.constant 0 : index
    %11 = vector.load %arg5[%c0_8, %c0_9] : memref<1x128xbf16, #tpu.memory_space<vmem>>, vector<1x128xbf16>
    %12 = vector.broadcast %11 : vector<1x128xbf16> to vector<8x128xbf16>
    %13 = arith.addf %10, %12 : vector<8x128xbf16>
    %cst_10 = arith.constant 0.000000e+00 : bf16
    %14 = vector.broadcast %cst_10 : bf16 to vector<8x128xbf16>
    %15 = arith.maximumf %13, %14 : vector<8x128xbf16>
    %c0_11 = arith.constant 0 : index
    %c0_12 = arith.constant 0 : index
    %16 = vector.load %arg6[%c0_11, %c0_12] : memref<128x128xbf16, #tpu.memory_space<vmem>>, vector<128x128xbf16>
    %cst_13 = arith.constant dense<0.000000e+00> : vector<8x128xf32>
    %17 = tpu.matmul %15, %16, %cst_13 {dimension_numbers = #tpu.dot_dimension_numbers<[1], [0], [0], [1], [0, 0, 1, 1], [], []>} : vector<8x128xbf16>, vector<128x128xbf16>, vector<8x128xf32> -> vector<8x128xf32>
    %c0_14 = arith.constant 0 : index
    %c0_15 = arith.constant 0 : index
    %18 = vector.load %arg7[%c0_14, %c0_15] : memref<1x128xbf16, #tpu.memory_space<vmem>>, vector<1x128xbf16>
    %19 = arith.extf %18 : vector<1x128xbf16> to vector<1x128xf32>
    %20 = vector.broadcast %19 : vector<1x128xf32> to vector<8x128xf32>
    %21 = arith.addf %17, %20 : vector<8x128xf32>
    %c0_16 = arith.constant 0 : index
    %c0_17 = arith.constant 0 : index
    %22 = vector.load %arg8[%c0_16, %c0_17] : memref<8x128xf32, #tpu.memory_space<vmem>>, vector<8x128xf32>
    tpu.vector_store %arg8[%c0_16, %c0_17], %21 {strides = array<i32>} : memref<8x128xf32, #tpu.memory_space<vmem>>, vector<8x128xf32>,
    return
  }
  func.func @transform_0(%arg0: i32) -> (i32, i32) {
    %c0_i32 = arith.constant 0 : i32
    %c0_i32_0 = arith.constant 0 : i32
    return %arg0, %c0_i32 : i32, i32
  }
  func.func @transform_1(%arg0: i32) -> (i32, i32) {
    %c0_i32 = arith.constant 0 : i32
    %c0_i32_0 = arith.constant 0 : i32
    %c0_i32_1 = arith.constant 0 : i32
    return %c0_i32, %c0_i32_0 : i32, i32
  }
  func.func @transform_2(%arg0: i32) -> (i32, i32) {
    %c0_i32 = arith.constant 0 : i32
    %c0_i32_0 = arith.constant 0 : i32
    %c0_i32_1 = arith.constant 0 : i32
    return %c0_i32, %c0_i32_0 : i32, i32
  }
  func.func @transform_3(%arg0: i32) -> (i32, i32) {
    %c0_i32 = arith.constant 0 : i32
    %c0_i32_0 = arith.constant 0 : i32
    %c0_i32_1 = arith.constant 0 : i32
    return %c0_i32, %c0_i32_0 : i32, i32
  }
  func.func @transform_4(%arg0: i32) -> (i32, i32) {
    %c0_i32 = arith.constant 0 : i32
    %c0_i32_0 = arith.constant 0 : i32
    %c0_i32_1 = arith.constant 0 : i32
    return %c0_i32, %c0_i32_0 : i32, i32
  }
  func.func @transform_5(%arg0: i32) -> (i32, i32) {
    %c0_i32 = arith.constant 0 : i32
    %c0_i32_0 = arith.constant 0 : i32
    %c0_i32_1 = arith.constant 0 : i32
    return %c0_i32, %c0_i32_0 : i32, i32
  }
  func.func @transform_6(%arg0: i32) -> (i32, i32) {
    %c0_i32 = arith.constant 0 : i32
    %c0_i32_0 = arith.constant 0 : i32
    %c0_i32_1 = arith.constant 0 : i32
    return %c0_i32, %c0_i32_0 : i32, i32
  }
  func.func @transform_7(%arg0: i32) -> (i32, i32) {
    %c0_i32 = arith.constant 0 : i32
    %c0_i32_0 = arith.constant 0 : i32
    return %arg0, %c0_i32 : i32, i32
  }
}

module attributes {stable_mosaic.version = 11 : i64} {
  func.func @_fused_mlp_kernel(%arg0: i32, %arg1: memref<8x16xf32, #tpu.memory_space<vmem>>, %arg2: memref<16x128xbf16, #tpu.memory_space<vmem>>, %arg3: memref<1x128xbf16, #tpu.memory_space<vmem>>, %arg4: memref<128x128xbf16, #tpu.memory_space<vmem>>, %arg5: memref<1x128xbf16, #tpu.memory_space<vmem>>, %arg6: memref<128x128xbf16, #tpu.memory_space<vmem>>, %arg7: memref<1x128xbf16, #tpu.memory_space<vmem>>, %arg8: memref<8x128xf32, #tpu.memory_space<vmem>>) attributes {dimension_semantics = [#tpu.dimension_semantics<parallel>], iteration_bounds = array<i64: 1>, scalar_prefetch = 0 : i64, scratch_operands = 0 : i64, tpu.core_type = #tpu.core_type<tc>, window_params = [{transform_indices = @transform_0, window_bounds = array<i64: 8, 16>}, {pipeline_mode = #tpu.pipeline_mode<synchronous>, transform_indices = @transform_1, window_bounds = array<i64: 16, 128>}, {pipeline_mode = #tpu.pipeline_mode<synchronous>, transform_indices = @transform_2, window_bounds = array<i64: 1, 128>}, {pipeline_mode = #tpu.pipeline_mode<synchronous>, transform_indices = @transform_3, window_bounds = array<i64: 128, 128>}, {pipeline_mode = #tpu.pipeline_mode<synchronous>, transform_indices = @transform_4, window_bounds = array<i64: 1, 128>}, {pipeline_mode = #tpu.pipeline_mode<synchronous>, transform_indices = @transform_5, window_bounds = array<i64: 128, 128>}, {pipeline_mode = #tpu.pipeline_mode<synchronous>, transform_indices = @transform_6, window_bounds = array<i64: 1, 128>}, {transform_indices = @transform_7, window_bounds = array<i64: 8, 128>}]} {
    %c0 = arith.constant 0 : index
    %c0_0 = arith.constant 0 : index
    %0 = vector.load %arg1[%c0, %c0_0] : memref<8x16xf32, #tpu.memory_space<vmem>>, vector<8x16xf32>
    %1 = arith.truncf %0 : vector<8x16xf32> to vector<8x16xbf16>
    %c0_1 = arith.constant 0 : index
    %c0_2 = arith.constant 0 : index
    %2 = vector.load %arg2[%c0_1, %c0_2] : memref<16x128xbf16, #tpu.memory_space<vmem>>, vector<16x128xbf16>
    %cst = arith.constant dense<0.000000e+00> : vector<8x128xf32>
    %3 = tpu.matmul %1, %2, %cst {dimension_numbers = #tpu.dot_dimension_numbers<[1], [0], [0], [1], [0, 0, 1, 1], [], []>} : vector<8x16xbf16>, vector<16x128xbf16>, vector<8x128xf32> -> vector<8x128xf32>
    %4 = arith.truncf %3 : vector<8x128xf32> to vector<8x128xbf16>
    %c0_3 = arith.constant 0 : index
    %c0_4 = arith.constant 0 : index
    %5 = vector.load %arg3[%c0_3, %c0_4] : memref<1x128xbf16, #tpu.memory_space<vmem>>, vector<1x128xbf16>
    %6 = vector.broadcast %5 : vector<1x128xbf16> to vector<8x128xbf16>
    %7 = arith.addf %4, %6 : vector<8x128xbf16>
    %c0_5 = arith.constant 0 : index
    %c0_6 = arith.constant 0 : index
    %8 = vector.load %arg4[%c0_5, %c0_6] : memref<128x128xbf16, #tpu.memory_space<vmem>>, vector<128x128xbf16>
    %cst_7 = arith.constant dense<0.000000e+00> : vector<8x128xf32>
    %9 = tpu.matmul %7, %8, %cst_7 {dimension_numbers = #tpu.dot_dimension_numbers<[1], [0], [0], [1], [0, 0, 1, 1], [], []>} : vector<8x128xbf16>, vector<128x128xbf16>, vector<8x128xf32> -> vector<8x128xf32>
    %10 = arith.truncf %9 : vector<8x128xf32> to vector<8x128xbf16>
    %c0_8 = arith.constant 0 : index
    %c0_9 = arith.constant 0 : index
    %11 = vector.load %arg5[%c0_8, %c0_9] : memref<1x128xbf16, #tpu.memory_space<vmem>>, vector<1x128xbf16>
    %12 = vector.broadcast %11 : vector<1x128xbf16> to vector<8x128xbf16>
    %13 = arith.addf %10, %12 : vector<8x128xbf16>
    %cst_10 = arith.constant 0.000000e+00 : bf16
    %14 = vector.broadcast %cst_10 : bf16 to vector<8x128xbf16>
    %15 = arith.maximumf %13, %14 : vector<8x128xbf16>
    %c0_11 = arith.constant 0 : index
    %c0_12 = arith.constant 0 : index
    %16 = vector.load %arg6[%c0_11, %c0_12] : memref<128x128xbf16, #tpu.memory_space<vmem>>, vector<128x128xbf16>
    %cst_13 = arith.constant dense<0.000000e+00> : vector<8x128xf32>
    %17 = tpu.matmul %15, %16, %cst_13 {dimension_numbers = #tpu.dot_dimension_numbers<[1], [0], [0], [1], [0, 0, 1, 1], [], []>} : vector<8x128xbf16>, vector<128x128xbf16>, vector<8x128xf32> -> vector<8x128xf32>
    %c0_14 = arith.constant 0 : index
    %c0_15 = arith.constant 0 : index
    %18 = vector.load %arg7[%c0_14, %c0_15] : memref<1x128xbf16, #tpu.memory_space<vmem>>, vector<1x128xbf16>
    %19 = arith.extf %18 : vector<1x128xbf16> to vector<1x128xf32>
    %20 = vector.broadcast %19 : vector<1x128xf32> to vector<8x128xf32>
    %21 = arith.addf %17, %20 : vector<8x128xf32>
    %c0_16 = arith.constant 0 : index
    %c0_17 = arith.constant 0 : index
    %22 = vector.load %arg8[%c0_16, %c0_17] : memref<8x128xf32, #tpu.memory_space<vmem>>, vector<8x128xf32>
    tpu.vector_store %arg8[%c0_16, %c0_17], %21 {strides = array<i32>} : memref<8x128xf32, #tpu.memory_space<vmem>>, vector<8x128xf32>,
    return
  }
  func.func @transform_0(%arg0: i32) -> (i32, i32) {
    %c0_i32 = arith.constant 0 : i32
    %c0_i32_0 = arith.constant 0 : i32
    return %arg0, %c0_i32 : i32, i32
  }
  func.func @transform_1(%arg0: i32) -> (i32, i32) {
    %c0_i32 = arith.constant 0 : i32
    %c0_i32_0 = arith.constant 0 : i32
    %c0_i32_1 = arith.constant 0 : i32
    return %c0_i32, %c0_i32_0 : i32, i32
  }
  func.func @transform_2(%arg0: i32) -> (i32, i32) {
    %c0_i32 = arith.constant 0 : i32
    %c0_i32_0 = arith.constant 0 : i32
    %c0_i32_1 = arith.constant 0 : i32
    return %c0_i32, %c0_i32_0 : i32, i32
  }
  func.func @transform_3(%arg0: i32) -> (i32, i32) {
    %c0_i32 = arith.constant 0 : i32
    %c0_i32_0 = arith.constant 0 : i32
    %c0_i32_1 = arith.constant 0 : i32
    return %c0_i32, %c0_i32_0 : i32, i32
  }
  func.func @transform_4(%arg0: i32) -> (i32, i32) {
    %c0_i32 = arith.constant 0 : i32
    %c0_i32_0 = arith.constant 0 : i32
    %c0_i32_1 = arith.constant 0 : i32
    return %c0_i32, %c0_i32_0 : i32, i32
  }
  func.func @transform_5(%arg0: i32) -> (i32, i32) {
    %c0_i32 = arith.constant 0 : i32
    %c0_i32_0 = arith.constant 0 : i32
    %c0_i32_1 = arith.constant 0 : i32
    return %c0_i32, %c0_i32_0 : i32, i32
  }
  func.func @transform_6(%arg0: i32) -> (i32, i32) {
    %c0_i32 = arith.constant 0 : i32
    %c0_i32_0 = arith.constant 0 : i32
    %c0_i32_1 = arith.constant 0 : i32
    return %c0_i32, %c0_i32_0 : i32, i32
  }
  func.func @transform_7(%arg0: i32) -> (i32, i32) {
    %c0_i32 = arith.constant 0 : i32
    %c0_i32_0 = arith.constant 0 : i32
    return %arg0, %c0_i32 : i32, i32
  }
}

</mosaic_0001>

<llo_original>
// kernel: tpu_custom_call.1
$region0: #{tpu_custom_call.1}
  #allocation0 [shape = 'u32[]', space=smem, size = 0x4, offset = 0x4, fixed_abs, tag = 'smem constant byte address 0x4 - core index']
  #allocation1 [shape = 'u32[72,128]{1,0:T(1,128)}', space=vmem, size = 0x9000, scoped, tag = 'internal scratch']
  %s0 = inlined_call_operand.hbm [shape: f32[8,16], index: 0, kind: input, shape index: {}]
  %s1 = inlined_call_operand.hbm [shape: bf16[16,128], index: 1, kind: input, shape index: {}]
  %s2 = inlined_call_operand.vmem [shape: bf16[1,128], index: 2, kind: input, shape index: {}]
  %s3 = inlined_call_operand.hbm [shape: bf16[128,128], index: 3, kind: input, shape index: {}]
  %s4 = inlined_call_operand.vmem [shape: bf16[1,128], index: 4, kind: input, shape index: {}]
  %s5 = inlined_call_operand.hbm [shape: bf16[128,128], index: 5, kind: input, shape index: {}]
  %s6 = inlined_call_operand.vmem [shape: bf16[1,128], index: 6, kind: input, shape index: {}]
  %s7 = inlined_call_operand.hbm [shape: f32[8,128], index: 7, kind: output, shape index: {}]
  %s8 = sld [smem:[#allocation0]]
  $region54: #{tpu_custom_call.1} parent=0
    _
  %s10 = ssub.s32 1, %s8
  %s11 = scalar_select 0, %s10, %s8
  $region1: #{tpu_custom_call.1} parent=0
    #allocation2 [shape = 'u8[4096]{0}', space=vmem, size = 0x1000, scoped, tag = 'input window, operand 0, single buffered']
    #allocation3 [shape = 's32[1]{0}', space=sflag, size = 0x4, scoped, tag = 'scoped memory for tpu_custom_call.1']
    #allocation4 [shape = 's32[1]{0}', space=sflag, size = 0x4, scoped, tag = 'scoped memory for tpu_custom_call.1']
    #allocation5 [shape = 'u8[4096]{0}', space=vmem, size = 0x1000, scoped, tag = 'input window, operand 1, single buffered']
    #allocation6 [shape = 's32[1]{0}', space=sflag, size = 0x4, scoped, tag = 'scoped memory for tpu_custom_call.1']
    #allocation7 [shape = 'u8[32768]{0}', space=vmem, size = 0x8000, scoped, tag = 'input window, operand 3, single buffered']
    #allocation8 [shape = 'u8[32768]{0}', space=vmem, size = 0x8000, scoped, tag = 'input window, operand 5, single buffered']
    #allocation9 [shape = 's32[1]{0}', space=sflag, size = 0x4, scoped, tag = 'scoped memory for tpu_custom_call.1']
    #allocation10 [shape = 'u8[4096]{0}', space=vmem, size = 0x1000, scoped, tag = 'output window, operand 0, single buffered']
    %12 = vsyncpa [#allocation3], 0
    %13 = vsyncpa [#allocation6], 0
    %14 = vsyncpa [#allocation9], 0
    %15 = vsyncpa [#allocation4], 0
    // Predicated region
    $region2: #{tpu_custom_call.1} parent=1 // pred_check
      _
    $region3: #{tpu_custom_call.1} parent=1 // pred_check_branch
      %17 = sbr.rel (0) target = $region5
    $region4: #{tpu_custom_call.1} parent=1 // pred_region
      %19 = vsyncadd [#allocation3], 0
      %s21 = sshll.u32 %s0, 4
      %s22 = int_to_ptr.hbm [resolvable:$true] %s21
      %s23 = sshll.u32 [#allocation2], 4
      %s24 = int_to_ptr.vmem [resolvable:$true] %s23
      %26 = dma.hbm_to_vmem [thread:$0]  %s22, 128, %s24, [#allocation3]
    $region5: #{tpu_custom_call.1} parent=1 // pred_fallthru
      _
    // Predicated region
    $region6: #{tpu_custom_call.1} parent=1 // pred_check
      _
    $region7: #{tpu_custom_call.1} parent=1 // pred_check_branch
      %28 = sbr.rel (0) target = $region9
    $region8: #{tpu_custom_call.1} parent=1 // pred_region
      %30 = vsyncadd [#allocation6], 0
      %s31 = sshll.u32 %s1, 4
      %s32 = int_to_ptr.hbm [resolvable:$true] %s31
      %s33 = sshll.u32 [#allocation5], 4
      %s34 = int_to_ptr.vmem [resolvable:$true] %s33
      %39 = dma.hbm_to_vmem [thread:$0]  %s32, 128, %s34, [#allocation6], 64, 64, 4
    $region9: #{tpu_custom_call.1} parent=1 // pred_fallthru
      _
    // Predicated region
    $region10: #{tpu_custom_call.1} parent=1 // pred_check
      _
    $region11: #{tpu_custom_call.1} parent=1 // pred_check_branch
      %41 = sbr.rel (0) target = $region13
    $region12: #{tpu_custom_call.1} parent=1 // pred_region
      _
    $region13: #{tpu_custom_call.1} parent=1 // pred_fallthru
      _
    // Predicated region
    $region14: #{tpu_custom_call.1} parent=1 // pred_check
      _
    $region15: #{tpu_custom_call.1} parent=1 // pred_check_branch
      %43 = sbr.rel (0) target = $region17
    $region16: #{tpu_custom_call.1} parent=1 // pred_region
      %45 = vsyncadd [#allocation6], 0
      %s46 = sshll.u32 %s3, 4
      %s47 = int_to_ptr.hbm [resolvable:$true] %s46
      %s48 = sshll.u32 [#allocation7], 4
      %s49 = int_to_ptr.vmem [resolvable:$true] %s48
      %54 = dma.hbm_to_vmem [thread:$0]  %s47, 1024, %s49, [#allocation6], 64, 64, 4
    $region17: #{tpu_custom_call.1} parent=1 // pred_fallthru
      _
    // Predicated region
    $region18: #{tpu_custom_call.1} parent=1 // pred_check
      _
    $region19: #{tpu_custom_call.1} parent=1 // pred_check_branch
      %56 = sbr.rel (0) target = $region21
    $region20: #{tpu_custom_call.1} parent=1 // pred_region
      _
    $region21: #{tpu_custom_call.1} parent=1 // pred_fallthru
      _
    // Predicated region
    $region22: #{tpu_custom_call.1} parent=1 // pred_check
      _
    $region23: #{tpu_custom_call.1} parent=1 // pred_check_branch
      %58 = sbr.rel (0) target = $region25
    $region24: #{tpu_custom_call.1} parent=1 // pred_region
      %60 = vsyncadd [#allocation9], 0
      %s61 = sshll.u32 %s5, 4
      %s62 = int_to_ptr.hbm [resolvable:$true] %s61
      %s63 = sshll.u32 [#allocation8], 4
      %s64 = int_to_ptr.vmem [resolvable:$true] %s63
      %69 = dma.hbm_to_vmem [thread:$0]  %s62, 1024, %s64, [#allocation9], 64, 64, 4
    $region25: #{tpu_custom_call.1} parent=1 // pred_fallthru
      _
    // Predicated region
    $region26: #{tpu_custom_call.1} parent=1 // pred_check
      _
    $region27: #{tpu_custom_call.1} parent=1 // pred_check_branch
      %71 = sbr.rel (0) target = $region29
    $region28: #{tpu_custom_call.1} parent=1 // pred_region
      _
    $region29: #{tpu_custom_call.1} parent=1 // pred_fallthru
      _
    // Predicated region
    $region30: #{tpu_custom_call.1} parent=1 // pred_check
      _
    $region31: #{tpu_custom_call.1} parent=1 // pred_check_branch
      %73 = sbr.rel (0) target = $region33
    $region32: #{tpu_custom_call.1} parent=1 // pred_region
      %75 = dma.done [#allocation3], 128
    $region33: #{tpu_custom_call.1} parent=1 // pred_fallthru
      _
    // Predicated region
    $region34: #{tpu_custom_call.1} parent=1 // pred_check
      _
    $region35: #{tpu_custom_call.1} parent=1 // pred_check_branch
      %77 = sbr.rel (0) target = $region37
    $region36: #{tpu_custom_call.1} parent=1 // pred_region
      %79 = dma.done [#allocation6], 128
    $region37: #{tpu_custom_call.1} parent=1 // pred_fallthru
      _
    // Predicated region
    $region38: #{tpu_custom_call.1} parent=1 // pred_check
      _
    $region39: #{tpu_custom_call.1} parent=1 // pred_check_branch
      %81 = sbr.rel (0) target = $region41
    $region40: #{tpu_custom_call.1} parent=1 // pred_region
      %83 = dma.done [#allocation6], 1024
    $region41: #{tpu_custom_call.1} parent=1 // pred_fallthru
      _
    // Predicated region
    $region42: #{tpu_custom_call.1} parent=1 // pred_check
      _
    $region43: #{tpu_custom_call.1} parent=1 // pred_check_branch
      %85 = sbr.rel (0) target = $region45
    $region44: #{tpu_custom_call.1} parent=1 // pred_region
      %87 = dma.done [#allocation9], 1024
    $region45: #{tpu_custom_call.1} parent=1 // pred_fallthru
      _
    %v89 = vld [vmem:[#allocation2] sm:$0xff]
    %v90 = vpack.c.bf16 %v89, %v89
    %v91 = vld [vmem:[#allocation5] sm:$0xf]
    %v92 = vld [vmem:[#allocation5 + $0x4] sm:$0xf]
    %v95 = vunpack.c.l.b16 %v91
    %v96 = vunpack.c.l.b16 %v92
    %v97 = vpack.c.b16 %v96, %v95
    %vm99 = vcmask 130048
    %v101 = vsel %vm99, %v90, 0
    %103 = vmatpush.bf16.msra.mxu0 0
    %104 = vmatpush.bf16.msra.mxu0 0
    %105 = vmatpush.bf16.msra.mxu0 0
    %106 = vmatpush.bf16.msra.mxu0 0
    %107 = vmatpush.bf16.msra.mxu0 0
    %108 = vmatpush.bf16.msra.mxu0 0
    %109 = vmatpush.bf16.msra.mxu0 0
    %110 = vmatpush.bf16.msra.mxu0 %v97
    %111 = vmatmul.bf16.gmra.mxu0 %v101
    %v112 = vpop.f32.mrf.mxu0
    %v113 = vadd.f32 0.0, %v112
    %v114 = vpop.f32.mrf.mxu0
    %115 = vdwg.mxu0
    %v116 = vpack.c.bf16 %v113, %v113
    %v117 = vld [vmem:[%s2] sm:$0x1]
    %v119 = vpack.i.b16 %v117, %v117
    %v121 = vperm.slane %v119, 0
    %v122 = vunpack.c.l.bf16 %v116
    %v123 = vunpack.c.l.bf16 %v121
    %v124 = vadd.f32 %v122, %v123
    %v125 = vpack.c.bf16 %v124, %v124
    %v126 = vld [vmem:[#allocation7] sm:$0xf]
    %v127 = vld [vmem:[#allocation7 + $0x4] sm:$0xf]
    %v128 = vld [vmem:[#allocation7 + $0x8] sm:$0xf]
    %v129 = vld [vmem:[#allocation7 + $0xc] sm:$0xf]
    %v130 = vld [vmem:[#allocation7 + $0x10] sm:$0xf]
    %v131 = vld [vmem:[#allocation7 + $0x14] sm:$0xf]
    %v132 = vld [vmem:[#allocation7 + $0x18] sm:$0xf]
    %v133 = vld [vmem:[#allocation7 + $0x1c] sm:$0xf]
    %v134 = vld [vmem:[#allocation7 + $0x20] sm:$0xf]
    %v135 = vld [vmem:[#allocation7 + $0x24] sm:$0xf]
    %v136 = vld [vmem:[#allocation7 + $0x28] sm:$0xf]
    %v137 = vld [vmem:[#allocation7 + $0x2c] sm:$0xf]
    %v138 = vld [vmem:[#allocation7 + $0x30] sm:$0xf]
    %v139 = vld [vmem:[#allocation7 + $0x34] sm:$0xf]
    %v140 = vld [vmem:[#allocation7 + $0x38] sm:$0xf]
    %v141 = vld [vmem:[#allocation7 + $0x3c] sm:$0xf]
    %v158 = vunpack.c.l.b16 %v126
    %v159 = vunpack.c.l.b16 %v127
    %v160 = vunpack.c.l.b16 %v128
    %v161 = vunpack.c.l.b16 %v129
    %v162 = vunpack.c.l.b16 %v130
    %v163 = vunpack.c.l.b16 %v131
    %v164 = vunpack.c.l.b16 %v132
    %v165 = vunpack.c.l.b16 %v133
    %v166 = vunpack.c.l.b16 %v134
    %v167 = vunpack.c.l.b16 %v135
    %v168 = vunpack.c.l.b16 %v136
    %v169 = vunpack.c.l.b16 %v137
    %v170 = vunpack.c.l.b16 %v138
    %v171 = vunpack.c.l.b16 %v139
    %v172 = vunpack.c.l.b16 %v140
    %v173 = vunpack.c.l.b16 %v141
    %v174 = vpack.c.b16 %v159, %v158
    %v175 = vpack.c.b16 %v161, %v160
    %v176 = vpack.c.b16 %v163, %v162
    %v177 = vpack.c.b16 %v165, %v164
    %v178 = vpack.c.b16 %v167, %v166
    %v179 = vpack.c.b16 %v169, %v168
    %v180 = vpack.c.b16 %v171, %v170
    %v181 = vpack.c.b16 %v173, %v172
    %190 = vmatpush.bf16.msra.mxu0 %v181
    %191 = vmatpush.bf16.msra.mxu0 %v180
    %192 = vmatpush.bf16.msra.mxu0 %v179
    %193 = vmatpush.bf16.msra.mxu0 %v178
    %194 = vmatpush.bf16.msra.mxu0 %v177
    %195 = vmatpush.bf16.msra.mxu0 %v176
    %196 = vmatpush.bf16.msra.mxu0 %v175
    %197 = vmatpush.bf16.msra.mxu0 %v174
    %198 = vmatmul.bf16.gmra.mxu0 %v125
    %v199 = vpop.f32.mrf.mxu0
    %v200 = vadd.f32 0.0, %v199
    %v201 = vpop.f32.mrf.mxu0
    %202 = vdwg.mxu0
    %v203 = vpack.c.bf16 %v200, %v200
    %v204 = vld [vmem:[%s4] sm:$0x1]
    %v206 = vpack.i.b16 %v204, %v204
    %v208 = vperm.slane %v206, 0
    %v209 = vunpack.c.l.bf16 %v203
    %v210 = vunpack.c.l.bf16 %v208
    %v211 = vadd.f32 %v209, %v210
    %v212 = vpack.c.bf16 %v211, %v211
    %v213 = vunpack.c.l.bf16 %v212
    %v214 = vmax.f32 %v213, 0.0
    %v215 = vpack.c.bf16 %v214, %v214
    %v216 = vld [vmem:[#allocation8] sm:$0xf]
    %v217 = vld [vmem:[#allocation8 + $0x4] sm:$0xf]
    %v218 = vld [vmem:[#allocation8 + $0x8] sm:$0xf]
    %v219 = vld [vmem:[#allocation8 + $0xc] sm:$0xf]
    %v220 = vld [vmem:[#allocation8 + $0x10] sm:$0xf]
    %v221 = vld [vmem:[#allocation8 + $0x14] sm:$0xf]
    %v222 = vld [vmem:[#allocation8 + $0x18] sm:$0xf]
    %v223 = vld [vmem:[#allocation8 + $0x1c] sm:$0xf]
    %v224 = vld [vmem:[#allocation8 + $0x20] sm:$0xf]
    %v225 = vld [vmem:[#allocation8 + $0x24] sm:$0xf]
    %v226 = vld [vmem:[#allocation8 + $0x28] sm:$0xf]
    %v227 = vld [vmem:[#allocation8 + $0x2c] sm:$0xf]
    %v228 = vld [vmem:[#allocation8 + $0x30] sm:$0xf]
    %v229 = vld [vmem:[#allocation8 + $0x34] sm:$0xf]
    %v230 = vld [vmem:[#allocation8 + $0x38] sm:$0xf]
    %v231 = vld [vmem:[#allocation8 + $0x3c] sm:$0xf]
    %v232 = vld [vmem:[%s6] sm:$0x1]
    %v233 = vunpack.c.l.bf16 %v232
    %v234 = vperm.slane %v233, 0
    %v251 = vunpack.c.l.b16 %v216
    %v252 = vunpack.c.l.b16 %v217
    %v253 = vunpack.c.l.b16 %v218
    %v254 = vunpack.c.l.b16 %v219
    %v255 = vunpack.c.l.b16 %v220
    %v256 = vunpack.c.l.b16 %v221
    %v257 = vunpack.c.l.b16 %v222
    %v258 = vunpack.c.l.b16 %v223
    %v259 = vunpack.c.l.b16 %v224
    %v260 = vunpack.c.l.b16 %v225
    %v261 = vunpack.c.l.b16 %v226
    %v262 = vunpack.c.l.b16 %v227
    %v263 = vunpack.c.l.b16 %v228
    %v264 = vunpack.c.l.b16 %v229
    %v265 = vunpack.c.l.b16 %v230
    %v266 = vunpack.c.l.b16 %v231
    %v267 = vpack.c.b16 %v252, %v251
    %v268 = vpack.c.b16 %v254, %v253
    %v269 = vpack.c.b16 %v256, %v255
    %v270 = vpack.c.b16 %v258, %v257
    %v271 = vpack.c.b16 %v260, %v259
    %v272 = vpack.c.b16 %v262, %v261
    %v273 = vpack.c.b16 %v264, %v263
    %v274 = vpack.c.b16 %v266, %v265
    %283 = vmatpush.bf16.msra.mxu0 %v274
    %284 = vmatpush.bf16.msra.mxu0 %v273
    %285 = vmatpush.bf16.msra.mxu0 %v272
    %286 = vmatpush.bf16.msra.mxu0 %v271
    %287 = vmatpush.bf16.msra.mxu0 %v270
    %288 = vmatpush.bf16.msra.mxu0 %v269
    %289 = vmatpush.bf16.msra.mxu0 %v268
    %290 = vmatpush.bf16.msra.mxu0 %v267
    %291 = vmatmul.bf16.gmra.mxu0 %v215
    %v292 = vpop.f32.mrf.mxu0
    %v293 = vadd.f32 %v234, %v292
    %v294 = vpop.f32.mrf.mxu0
    %295 = vdwg.mxu0
    %296 = vst [vmem:[#allocation10] sm:$0xff] %v293
    // Predicated region
    $region46: #{tpu_custom_call.1} parent=1 // pred_check
      _
    $region47: #{tpu_custom_call.1} parent=1 // pred_check_branch
      %298 = sbr.rel (0) target = $region49
    $region48: #{tpu_custom_call.1} parent=1 // pred_region
      %300 = vsyncadd [#allocation4], 0
      %s302 = sshll.u32 [#allocation10], 4
      %s303 = int_to_ptr.vmem [resolvable:$true] %s302
      %s304 = sshll.u32 %s7, 4
      %s305 = int_to_ptr.hbm [resolvable:$true] %s304
      %307 = dma.vmem_to_hbm [thread:$0]  %s303, 128, %s305, [#allocation4]
    $region49: #{tpu_custom_call.1} parent=1 // pred_fallthru
      _
    // Predicated region
    $region50: #{tpu_custom_call.1} parent=1 // pred_check
      _
    $region51: #{tpu_custom_call.1} parent=1 // pred_check_branch
      %309 = sbr.rel (0) target = $region53
    $region52: #{tpu_custom_call.1} parent=1 // pred_region
      %311 = dma.done [#allocation4], 128
    $region53: #{tpu_custom_call.1} parent=1 // pred_fallthru
      _
    %312 = vsyncpa [#allocation3], 1
    %313 = vsyncpa [#allocation6], 1
    %314 = vsyncpa [#allocation9], 1
    %315 = vsyncpa [#allocation4], 1

// kernel: tpu_custom_call.1
$region0: #{tpu_custom_call.1}
  #allocation0 [shape = 'u32[]', space=smem, size = 0x4, offset = 0x4, fixed_abs, tag = 'smem constant byte address 0x4 - core index']
  #allocation1 [shape = 'u32[72,128]{1,0:T(1,128)}', space=vmem, size = 0x9000, scoped, tag = 'internal scratch']
  %s0 = inlined_call_operand.hbm [shape: f32[8,16], index: 0, kind: input, shape index: {}]
  %s1 = inlined_call_operand.hbm [shape: bf16[16,128], index: 1, kind: input, shape index: {}]
  %s2 = inlined_call_operand.vmem [shape: bf16[1,128], index: 2, kind: input, shape index: {}]
  %s3 = inlined_call_operand.hbm [shape: bf16[128,128], index: 3, kind: input, shape index: {}]
  %s4 = inlined_call_operand.vmem [shape: bf16[1,128], index: 4, kind: input, shape index: {}]
  %s5 = inlined_call_operand.hbm [shape: bf16[128,128], index: 5, kind: input, shape index: {}]
  %s6 = inlined_call_operand.vmem [shape: bf16[1,128], index: 6, kind: input, shape index: {}]
  %s7 = inlined_call_operand.hbm [shape: f32[8,128], index: 7, kind: output, shape index: {}]
  %s8 = sld [smem:[#allocation0]]
  $region54: #{tpu_custom_call.1} parent=0
    _
  %s10 = ssub.s32 1, %s8
  %s11 = scalar_select 0, %s10, %s8
  $region1: #{tpu_custom_call.1} parent=0
    #allocation2 [shape = 'u8[4096]{0}', space=vmem, size = 0x1000, scoped, tag = 'input window, operand 0, single buffered']
    #allocation3 [shape = 's32[1]{0}', space=sflag, size = 0x4, scoped, tag = 'scoped memory for tpu_custom_call.1']
    #allocation4 [shape = 's32[1]{0}', space=sflag, size = 0x4, scoped, tag = 'scoped memory for tpu_custom_call.1']
    #allocation5 [shape = 'u8[4096]{0}', space=vmem, size = 0x1000, scoped, tag = 'input window, operand 1, single buffered']
    #allocation6 [shape = 's32[1]{0}', space=sflag, size = 0x4, scoped, tag = 'scoped memory for tpu_custom_call.1']
    #allocation7 [shape = 'u8[32768]{0}', space=vmem, size = 0x8000, scoped, tag = 'input window, operand 3, single buffered']
    #allocation8 [shape = 'u8[32768]{0}', space=vmem, size = 0x8000, scoped, tag = 'input window, operand 5, single buffered']
    #allocation9 [shape = 's32[1]{0}', space=sflag, size = 0x4, scoped, tag = 'scoped memory for tpu_custom_call.1']
    #allocation10 [shape = 'u8[4096]{0}', space=vmem, size = 0x1000, scoped, tag = 'output window, operand 0, single buffered']
    %12 = vsyncpa [#allocation3], 0
    %13 = vsyncpa [#allocation6], 0
    %14 = vsyncpa [#allocation9], 0
    %15 = vsyncpa [#allocation4], 0
    // Predicated region
    $region2: #{tpu_custom_call.1} parent=1 // pred_check
      _
    $region3: #{tpu_custom_call.1} parent=1 // pred_check_branch
      %17 = sbr.rel (0) target = $region5
    $region4: #{tpu_custom_call.1} parent=1 // pred_region
      %19 = vsyncadd [#allocation3], 0
      %s21 = sshll.u32 %s0, 4
      %s22 = int_to_ptr.hbm [resolvable:$true] %s21
      %s23 = sshll.u32 [#allocation2], 4
      %s24 = int_to_ptr.vmem [resolvable:$true] %s23
      %26 = dma.hbm_to_vmem [thread:$0]  %s22, 128, %s24, [#allocation3]
    $region5: #{tpu_custom_call.1} parent=1 // pred_fallthru
      _
    // Predicated region
    $region6: #{tpu_custom_call.1} parent=1 // pred_check
      _
    $region7: #{tpu_custom_call.1} parent=1 // pred_check_branch
      %28 = sbr.rel (0) target = $region9
    $region8: #{tpu_custom_call.1} parent=1 // pred_region
      %30 = vsyncadd [#allocation6], 0
      %s31 = sshll.u32 %s1, 4
      %s32 = int_to_ptr.hbm [resolvable:$true] %s31
      %s33 = sshll.u32 [#allocation5], 4
      %s34 = int_to_ptr.vmem [resolvable:$true] %s33
      %39 = dma.hbm_to_vmem [thread:$0]  %s32, 128, %s34, [#allocation6], 64, 64, 4
    $region9: #{tpu_custom_call.1} parent=1 // pred_fallthru
      _
    // Predicated region
    $region10: #{tpu_custom_call.1} parent=1 // pred_check
      _
    $region11: #{tpu_custom_call.1} parent=1 // pred_check_branch
      %41 = sbr.rel (0) target = $region13
    $region12: #{tpu_custom_call.1} parent=1 // pred_region
      _
    $region13: #{tpu_custom_call.1} parent=1 // pred_fallthru
      _
    // Predicated region
    $region14: #{tpu_custom_call.1} parent=1 // pred_check
      _
    $region15: #{tpu_custom_call.1} parent=1 // pred_check_branch
      %43 = sbr.rel (0) target = $region17
    $region16: #{tpu_custom_call.1} parent=1 // pred_region
      %45 = vsyncadd [#allocation6], 0
      %s46 = sshll.u32 %s3, 4
      %s47 = int_to_ptr.hbm [resolvable:$true] %s46
      %s48 = sshll.u32 [#allocation7], 4
      %s49 = int_to_ptr.vmem [resolvable:$true] %s48
      %54 = dma.hbm_to_vmem [thread:$0]  %s47, 1024, %s49, [#allocation6], 64, 64, 4
    $region17: #{tpu_custom_call.1} parent=1 // pred_fallthru
      _
    // Predicated region
    $region18: #{tpu_custom_call.1} parent=1 // pred_check
      _
    $region19: #{tpu_custom_call.1} parent=1 // pred_check_branch
      %56 = sbr.rel (0) target = $region21
    $region20: #{tpu_custom_call.1} parent=1 // pred_region
      _
    $region21: #{tpu_custom_call.1} parent=1 // pred_fallthru
      _
    // Predicated region
    $region22: #{tpu_custom_call.1} parent=1 // pred_check
      _
    $region23: #{tpu_custom_call.1} parent=1 // pred_check_branch
      %58 = sbr.rel (0) target = $region25
    $region24: #{tpu_custom_call.1} parent=1 // pred_region
      %60 = vsyncadd [#allocation9], 0
      %s61 = sshll.u32 %s5, 4
      %s62 = int_to_ptr.hbm [resolvable:$true] %s61
      %s63 = sshll.u32 [#allocation8], 4
      %s64 = int_to_ptr.vmem [resolvable:$true] %s63
      %69 = dma.hbm_to_vmem [thread:$0]  %s62, 1024, %s64, [#allocation9], 64, 64, 4
    $region25: #{tpu_custom_call.1} parent=1 // pred_fallthru
      _
    // Predicated region
    $region26: #{tpu_custom_call.1} parent=1 // pred_check
      _
    $region27: #{tpu_custom_call.1} parent=1 // pred_check_branch
      %71 = sbr.rel (0) target = $region29
    $region28: #{tpu_custom_call.1} parent=1 // pred_region
      _
    $region29: #{tpu_custom_call.1} parent=1 // pred_fallthru
      _
    // Predicated region
    $region30: #{tpu_custom_call.1} parent=1 // pred_check
      _
    $region31: #{tpu_custom_call.1} parent=1 // pred_check_branch
      %73 = sbr.rel (0) target = $region33
    $region32: #{tpu_custom_call.1} parent=1 // pred_region
      %75 = dma.done [#allocation3], 128
    $region33: #{tpu_custom_call.1} parent=1 // pred_fallthru
      _
    // Predicated region
    $region34: #{tpu_custom_call.1} parent=1 // pred_check
      _
    $region35: #{tpu_custom_call.1} parent=1 // pred_check_branch
      %77 = sbr.rel (0) target = $region37
    $region36: #{tpu_custom_call.1} parent=1 // pred_region
      %79 = dma.done [#allocation6], 128
    $region37: #{tpu_custom_call.1} parent=1 // pred_fallthru
      _
    // Predicated region
    $region38: #{tpu_custom_call.1} parent=1 // pred_check
      _
    $region39: #{tpu_custom_call.1} parent=1 // pred_check_branch
      %81 = sbr.rel (0) target = $region41
    $region40: #{tpu_custom_call.1} parent=1 // pred_region
      %83 = dma.done [#allocation6], 1024
    $region41: #{tpu_custom_call.1} parent=1 // pred_fallthru
      _
    // Predicated region
    $region42: #{tpu_custom_call.1} parent=1 // pred_check
      _
    $region43: #{tpu_custom_call.1} parent=1 // pred_check_branch
      %85 = sbr.rel (0) target = $region45
    $region44: #{tpu_custom_call.1} parent=1 // pred_region
      %87 = dma.done [#allocation9], 1024
    $region45: #{tpu_custom_call.1} parent=1 // pred_fallthru
      _
    %v89 = vld [vmem:[#allocation2] sm:$0xff]
    %v90 = vpack.c.bf16 %v89, %v89
    %v91 = vld [vmem:[#allocation5] sm:$0xf]
    %v92 = vld [vmem:[#allocation5 + $0x4] sm:$0xf]
    %v95 = vunpack.c.l.b16 %v91
    %v96 = vunpack.c.l.b16 %v92
    %v97 = vpack.c.b16 %v96, %v95
    %vm99 = vcmask 130048
    %v101 = vsel %vm99, %v90, 0
    %103 = vmatpush.bf16.msra.mxu0 0
    %104 = vmatpush.bf16.msra.mxu0 0
    %105 = vmatpush.bf16.msra.mxu0 0
    %106 = vmatpush.bf16.msra.mxu0 0
    %107 = vmatpush.bf16.msra.mxu0 0
    %108 = vmatpush.bf16.msra.mxu0 0
    %109 = vmatpush.bf16.msra.mxu0 0
    %110 = vmatpush.bf16.msra.mxu0 %v97
    %111 = vmatmul.bf16.gmra.mxu0 %v101
    %v112 = vpop.f32.mrf.mxu0
    %v113 = vadd.f32 0.0, %v112
    %v114 = vpop.f32.mrf.mxu0
    %115 = vdwg.mxu0
    %v116 = vpack.c.bf16 %v113, %v113
    %v117 = vld [vmem:[%s2] sm:$0x1]
    %v119 = vpack.i.b16 %v117, %v117
    %v121 = vperm.slane %v119, 0
    %v122 = vunpack.c.l.bf16 %v116
    %v123 = vunpack.c.l.bf16 %v121
    %v124 = vadd.f32 %v122, %v123
    %v125 = vpack.c.bf16 %v124, %v124
    %v126 = vld [vmem:[#allocation7] sm:$0xf]
    %v127 = vld [vmem:[#allocation7 + $0x4] sm:$0xf]
    %v128 = vld [vmem:[#allocation7 + $0x8] sm:$0xf]
    %v129 = vld [vmem:[#allocation7 + $0xc] sm:$0xf]
    %v130 = vld [vmem:[#allocation7 + $0x10] sm:$0xf]
    %v131 = vld [vmem:[#allocation7 + $0x14] sm:$0xf]
    %v132 = vld [vmem:[#allocation7 + $0x18] sm:$0xf]
    %v133 = vld [vmem:[#allocation7 + $0x1c] sm:$0xf]
    %v134 = vld [vmem:[#allocation7 + $0x20] sm:$0xf]
    %v135 = vld [vmem:[#allocation7 + $0x24] sm:$0xf]
    %v136 = vld [vmem:[#allocation7 + $0x28] sm:$0xf]
    %v137 = vld [vmem:[#allocation7 + $0x2c] sm:$0xf]
    %v138 = vld [vmem:[#allocation7 + $0x30] sm:$0xf]
    %v139 = vld [vmem:[#allocation7 + $0x34] sm:$0xf]
    %v140 = vld [vmem:[#allocation7 + $0x38] sm:$0xf]
    %v141 = vld [vmem:[#allocation7 + $0x3c] sm:$0xf]
    %v158 = vunpack.c.l.b16 %v126
    %v159 = vunpack.c.l.b16 %v127
    %v160 = vunpack.c.l.b16 %v128
    %v161 = vunpack.c.l.b16 %v129
    %v162 = vunpack.c.l.b16 %v130
    %v163 = vunpack.c.l.b16 %v131
    %v164 = vunpack.c.l.b16 %v132
    %v165 = vunpack.c.l.b16 %v133
    %v166 = vunpack.c.l.b16 %v134
    %v167 = vunpack.c.l.b16 %v135
    %v168 = vunpack.c.l.b16 %v136
    %v169 = vunpack.c.l.b16 %v137
    %v170 = vunpack.c.l.b16 %v138
    %v171 = vunpack.c.l.b16 %v139
    %v172 = vunpack.c.l.b16 %v140
    %v173 = vunpack.c.l.b16 %v141
    %v174 = vpack.c.b16 %v159, %v158
    %v175 = vpack.c.b16 %v161, %v160
    %v176 = vpack.c.b16 %v163, %v162
    %v177 = vpack.c.b16 %v165, %v164
    %v178 = vpack.c.b16 %v167, %v166
    %v179 = vpack.c.b16 %v169, %v168
    %v180 = vpack.c.b16 %v171, %v170
    %v181 = vpack.c.b16 %v173, %v172
    %190 = vmatpush.bf16.msra.mxu0 %v181
    %191 = vmatpush.bf16.msra.mxu0 %v180
    %192 = vmatpush.bf16.msra.mxu0 %v179
    %193 = vmatpush.bf16.msra.mxu0 %v178
    %194 = vmatpush.bf16.msra.mxu0 %v177
    %195 = vmatpush.bf16.msra.mxu0 %v176
    %196 = vmatpush.bf16.msra.mxu0 %v175
    %197 = vmatpush.bf16.msra.mxu0 %v174
    %198 = vmatmul.bf16.gmra.mxu0 %v125
    %v199 = vpop.f32.mrf.mxu0
    %v200 = vadd.f32 0.0, %v199
    %v201 = vpop.f32.mrf.mxu0
    %202 = vdwg.mxu0
    %v203 = vpack.c.bf16 %v200, %v200
    %v204 = vld [vmem:[%s4] sm:$0x1]
    %v206 = vpack.i.b16 %v204, %v204
    %v208 = vperm.slane %v206, 0
    %v209 = vunpack.c.l.bf16 %v203
    %v210 = vunpack.c.l.bf16 %v208
    %v211 = vadd.f32 %v209, %v210
    %v212 = vpack.c.bf16 %v211, %v211
    %v213 = vunpack.c.l.bf16 %v212
    %v214 = vmax.f32 %v213, 0.0
    %v215 = vpack.c.bf16 %v214, %v214
    %v216 = vld [vmem:[#allocation8] sm:$0xf]
    %v217 = vld [vmem:[#allocation8 + $0x4] sm:$0xf]
    %v218 = vld [vmem:[#allocation8 + $0x8] sm:$0xf]
    %v219 = vld [vmem:[#allocation8 + $0xc] sm:$0xf]
    %v220 = vld [vmem:[#allocation8 + $0x10] sm:$0xf]
    %v221 = vld [vmem:[#allocation8 + $0x14] sm:$0xf]
    %v222 = vld [vmem:[#allocation8 + $0x18] sm:$0xf]
    %v223 = vld [vmem:[#allocation8 + $0x1c] sm:$0xf]
    %v224 = vld [vmem:[#allocation8 + $0x20] sm:$0xf]
    %v225 = vld [vmem:[#allocation8 + $0x24] sm:$0xf]
    %v226 = vld [vmem:[#allocation8 + $0x28] sm:$0xf]
    %v227 = vld [vmem:[#allocation8 + $0x2c] sm:$0xf]
    %v228 = vld [vmem:[#allocation8 + $0x30] sm:$0xf]
    %v229 = vld [vmem:[#allocation8 + $0x34] sm:$0xf]
    %v230 = vld [vmem:[#allocation8 + $0x38] sm:$0xf]
    %v231 = vld [vmem:[#allocation8 + $0x3c] sm:$0xf]
    %v232 = vld [vmem:[%s6] sm:$0x1]
    %v233 = vunpack.c.l.bf16 %v232
    %v234 = vperm.slane %v233, 0
    %v251 = vunpack.c.l.b16 %v216
    %v252 = vunpack.c.l.b16 %v217
    %v253 = vunpack.c.l.b16 %v218
    %v254 = vunpack.c.l.b16 %v219
    %v255 = vunpack.c.l.b16 %v220
    %v256 = vunpack.c.l.b16 %v221
    %v257 = vunpack.c.l.b16 %v222
    %v258 = vunpack.c.l.b16 %v223
    %v259 = vunpack.c.l.b16 %v224
    %v260 = vunpack.c.l.b16 %v225
    %v261 = vunpack.c.l.b16 %v226
    %v262 = vunpack.c.l.b16 %v227
    %v263 = vunpack.c.l.b16 %v228
    %v264 = vunpack.c.l.b16 %v229
    %v265 = vunpack.c.l.b16 %v230
    %v266 = vunpack.c.l.b16 %v231
    %v267 = vpack.c.b16 %v252, %v251
    %v268 = vpack.c.b16 %v254, %v253
    %v269 = vpack.c.b16 %v256, %v255
    %v270 = vpack.c.b16 %v258, %v257
    %v271 = vpack.c.b16 %v260, %v259
    %v272 = vpack.c.b16 %v262, %v261
    %v273 = vpack.c.b16 %v264, %v263
    %v274 = vpack.c.b16 %v266, %v265
    %283 = vmatpush.bf16.msra.mxu0 %v274
    %284 = vmatpush.bf16.msra.mxu0 %v273
    %285 = vmatpush.bf16.msra.mxu0 %v272
    %286 = vmatpush.bf16.msra.mxu0 %v271
    %287 = vmatpush.bf16.msra.mxu0 %v270
    %288 = vmatpush.bf16.msra.mxu0 %v269
    %289 = vmatpush.bf16.msra.mxu0 %v268
    %290 = vmatpush.bf16.msra.mxu0 %v267
    %291 = vmatmul.bf16.gmra.mxu0 %v215
    %v292 = vpop.f32.mrf.mxu0
    %v293 = vadd.f32 %v234, %v292
    %v294 = vpop.f32.mrf.mxu0
    %295 = vdwg.mxu0
    %296 = vst [vmem:[#allocation10] sm:$0xff] %v293
    // Predicated region
    $region46: #{tpu_custom_call.1} parent=1 // pred_check
      _
    $region47: #{tpu_custom_call.1} parent=1 // pred_check_branch
      %298 = sbr.rel (0) target = $region49
    $region48: #{tpu_custom_call.1} parent=1 // pred_region
      %300 = vsyncadd [#allocation4], 0
      %s302 = sshll.u32 [#allocation10], 4
      %s303 = int_to_ptr.vmem [resolvable:$true] %s302
      %s304 = sshll.u32 %s7, 4
      %s305 = int_to_ptr.hbm [resolvable:$true] %s304
      %307 = dma.vmem_to_hbm [thread:$0]  %s303, 128, %s305, [#allocation4]
    $region49: #{tpu_custom_call.1} parent=1 // pred_fallthru
      _
    // Predicated region
    $region50: #{tpu_custom_call.1} parent=1 // pred_check
      _
    $region51: #{tpu_custom_call.1} parent=1 // pred_check_branch
      %309 = sbr.rel (0) target = $region53
    $region52: #{tpu_custom_call.1} parent=1 // pred_region
      %311 = dma.done [#allocation4], 128
    $region53: #{tpu_custom_call.1} parent=1 // pred_fallthru
      _
    %312 = vsyncpa [#allocation3], 1
    %313 = vsyncpa [#allocation6], 1
    %314 = vsyncpa [#allocation9], 1
    %315 = vsyncpa [#allocation4], 1

</llo_original>
